<compile_context>
chip_gen: v7x
topology: tpu7x:2x2x1
jax: 0.10.0
libtpu: 0.0.40
codegen_flags: <defaults>
</compile_context>

<pallas_src>
import math
from functools import partial

import jax
import jax.numpy as jnp
from jax.experimental import pallas as pl
from jax.experimental.pallas import tpu as pltpu

TEMPERATURE = 0.1
BACKBONE_DIM = 512
PROJ_DIM = 128
LABEL_NUM = 10


def _pad_dim(x, axis, target):
    pad = target - x.shape[axis]
    if pad <= 0:
        return x
    widths = [(0, 0)] * x.ndim
    widths[axis] = (0, pad)
    return jnp.pad(x, widths)


def _choose_k_tiling(in_dim, n_split, two_b, tk_max):
    """Pick the K tile so that
       * it is a multiple of 128,
       * the zero-padded input dim divides evenly into n_split * nk tiles,
       * double-buffered (y, wb) blocks stay under ~40 MiB (v7x 64 MiB safe),
       * per-core cost  (streamed columns + nk * fixed-step-overhead)  is
         minimal, trading the ~0.35 us grid-step cost against zero-pad waste.
    """
    budget = 40 * 1024 * 1024
    # 2 buffers * 2 bytes/elt * tk * (2B rows of y + 512 rows of wb)
    cap = budget // (4 * (two_b + BACKBONE_DIM))
    cap = max(128, (cap // 128) * 128)
    tk_max = max(128, min((int(tk_max) // 128) * 128, cap))

    overhead_cols = 384  # ~0.35 us per grid step expressed in wb columns
    best = None
    for tk in range(tk_max, 127, -128):
        step = n_split * tk
        in_p = ((in_dim + step - 1) // step) * step
        k_per = in_p // n_split
        nk = k_per // tk
        cost = k_per + nk * overhead_cols
        if best is None or cost < best[0]:
            best = (cost, tk, in_p, nk)
    _, tk, in_p, nk = best
    return tk, in_p, nk


# --------------------------------------------------------------------------
# Call 1: backbone stand-in matmul, K split across n_split "cores".
# --------------------------------------------------------------------------
def backbone_kernel(y_ref, wb_ref, out_ref):
    @pl.when(pl.program_id(1) == 0)
    def _():
        out_ref[...] = jnp.zeros_like(out_ref)

    out_ref[...] += jnp.dot(y_ref[...], wb_ref[...],
                            preferred_element_type=jnp.float32)


# --------------------------------------------------------------------------
# Call 2: tiny fused epilogue (partial-sum, bias+ReLU, projector|head matmul,
#         symmetric InfoNCE, CE + accuracy).
# --------------------------------------------------------------------------
def epilogue_kernel(part_ref, labels_ref, bb_ref, wph_ref, bh_ref,
                    loss_ref, acc_ref, *, num_labels, proj_dim, temperature):
    # sum the per-core K partials, add bias, ReLU  -> (2B, 512) f32
    r = jnp.maximum(jnp.sum(part_ref[...], axis=0) + bb_ref[...], 0.0)
    r_bf = r.astype(jnp.bfloat16)

    # one matmul for projector + online head: (2B, 512) x (512, 128 + Lp)
    ph = jnp.dot(r_bf, wph_ref[...], preferred_element_type=jnp.float32)
    two_b = ph.shape[0]
    b = two_b // 2
    inv_t = jnp.float32(1.0 / temperature)

    # -------- symmetric InfoNCE (logits computed once) --------
    z = ph[:, :proj_dim]                                    # (2B, 128) f32
    sumsq = jnp.sum(z * z, axis=1, keepdims=True)
    zn = z * jax.lax.rsqrt(jnp.maximum(sumsq, 1e-24))       # == z / max(||z||,1e-12)
    an = zn[:b]
    bn = zn[b:]

    # an @ bn^T without materializing a transpose
    logits = jax.lax.dot_general(
        an, bn, (((1,), (1,)), ((), ())),
        preferred_element_type=jnp.float32) * inv_t         # (B, B)

    row_max = jnp.max(logits, axis=1, keepdims=True)
    lse_r = jnp.log(jnp.sum(jnp.exp(logits - row_max), axis=1,
                            keepdims=True)) + row_max
    col_max = jnp.max(logits, axis=0, keepdims=True)
    lse_c = jnp.log(jnp.sum(jnp.exp(logits - col_max), axis=0,
                            keepdims=True)) + col_max
    # diagonal directly from the normalized features (no (B,B) iota/where)
    diag = jnp.sum(an * bn, axis=1, keepdims=True) * inv_t  # (B, 1)
    nce_loss = 0.5 * (jnp.mean(lse_r) + jnp.mean(lse_c)) - jnp.mean(diag)

    # -------- online head: CE + accuracy on r1 (detach is a fwd no-op) -----
    logits_h = ph[:b, proj_dim:] + bh_ref[...]              # (B, Lp) f32
    l_pad = logits_h.shape[1]
    hcol = jax.lax.broadcasted_iota(jnp.int32, logits_h.shape, 1)
    valid = hcol < num_labels
    logits_m = jnp.where(valid, logits_h, jnp.float32(-1e30))

    labels = labels_ref[...]                                # (B, 1) i32
    rmax_h = jnp.max(logits_m, axis=1, keepdims=True)
    lse_h = jnp.log(jnp.sum(jnp.exp(logits_m - rmax_h), axis=1,
                            keepdims=True)) + rmax_h
    label_logit = jnp.sum(jnp.where(hcol == labels, logits_m, 0.0),
                          axis=1, keepdims=True)
    cls_loss = jnp.mean(lse_h - label_logit)

    # argmax = first occurrence of the row max (PyTorch semantics), pads excluded
    idx_or_big = jnp.where((logits_m == rmax_h) & valid, hcol, l_pad)
    pred = jnp.min(idx_or_big, axis=1, keepdims=True)       # (B, 1)
    acc = jnp.mean((pred == labels).astype(jnp.float32))

    loss_ref[0, 0] = nce_loss + cls_loss
    acc_ref[0, 0] = acc


def clr_forward(y1, y2, labels, params, *, tk_max=4096, n_split=2):
    """y1, y2: (B, C, H, W) f32 (NCHW); labels: (B,) int32."""
    B = y1.shape[0]
    two_b = 2 * B
    in_dim = math.prod(y1.shape[1:])
    L = params["wh"].shape[1]

    tk, in_p, nk_per = _choose_k_tiling(in_dim, n_split, two_b, tk_max)
    l_p = ((L + 127) // 128) * 128

    # Stack the two views in bf16 (no f32 (2B, in_p) intermediate).
    y = jnp.concatenate(
        [y1.reshape(B, -1).astype(jnp.bfloat16),
         y2.reshape(B, -1).astype(jnp.bfloat16)], axis=0)
    y = _pad_dim(y, 1, in_p)                                         # (2B, in_p)

    wb = _pad_dim(params["wb"].astype(jnp.bfloat16), 0, in_p)        # (in_p, 512)
    bb = params["bb"].astype(jnp.float32).reshape(1, BACKBONE_DIM)
    wp = params["wp"].astype(jnp.bfloat16)                           # (512, 128)
    wh = _pad_dim(params["wh"].astype(jnp.bfloat16), 1, l_p)         # (512, l_p)
    wph = jnp.concatenate([wp, wh], axis=1)                          # (512, 128+l_p)
    bh = _pad_dim(params["bh"].astype(jnp.float32).reshape(1, L), 1, l_p)
    labels2 = labels.reshape(B, 1).astype(jnp.int32)
    n_out = PROJ_DIM + l_p

    # ----------------- call 1: streamed backbone matmul -----------------
    part_bytes = n_split * two_b * BACKBONE_DIM * 4
    vmem_need = (2 * (two_b * tk * 2 + tk * BACKBONE_DIM * 2)   # dbl-buffered in
                 + 2 * two_b * BACKBONE_DIM * 4)                # output block
    vmem_limit = int(min(64 << 20, max(32 << 20, vmem_need + (8 << 20))))

    partials = pl.pallas_call(
        backbone_kernel,
        out_shape=jax.ShapeDtypeStruct((n_split, two_b, BACKBONE_DIM),
                                       jnp.float32),
        grid_spec=pltpu.PrefetchScalarGridSpec(
            num_scalar_prefetch=0,
            grid=(n_split, nk_per),
            in_specs=[
                pl.BlockSpec((two_b, tk),
                             lambda s, k: (0, s * nk_per + k)),          # y
                pl.BlockSpec((tk, BACKBONE_DIM),
                             lambda s, k: (s * nk_per + k, 0)),          # wb
            ],
            out_specs=pl.BlockSpec((None, two_b, BACKBONE_DIM),
                                   lambda s, k: (s, 0, 0)),
        ),
        compiler_params=pltpu.CompilerParams(
            dimension_semantics=("parallel", "arbitrary"),
            vmem_limit_bytes=vmem_limit),
        cost_estimate=pl.CostEstimate(
            flops=int(2 * two_b * in_p * BACKBONE_DIM),
            transcendentals=0,
            bytes_accessed=int(y.nbytes + wb.nbytes + part_bytes)),
    )(y, wb)

    # ----------------- call 2: fused epilogue -----------------
    kernel = partial(epilogue_kernel, num_labels=L, proj_dim=PROJ_DIM,
                     temperature=TEMPERATURE)
    epi_vmem = int(min(64 << 20, max(32 << 20, 4 * part_bytes)))

    loss, acc = pl.pallas_call(
        kernel,
        out_shape=(jax.ShapeDtypeStruct((1, 1), jnp.float32),
                   jax.ShapeDtypeStruct((1, 1), jnp.float32)),
        grid_spec=pltpu.PrefetchScalarGridSpec(
            num_scalar_prefetch=0,
            grid=(1,),
            in_specs=[
                pl.BlockSpec((n_split, two_b, BACKBONE_DIM),
                             lambda i: (0, 0, 0)),                       # partials
                pl.BlockSpec((B, 1), lambda i: (0, 0)),                  # labels
                pl.BlockSpec((1, BACKBONE_DIM), lambda i: (0, 0)),       # bb
                pl.BlockSpec((BACKBONE_DIM, n_out), lambda i: (0, 0)),   # [wp|wh]
                pl.BlockSpec((1, l_p), lambda i: (0, 0)),                # bh
            ],
            out_specs=(
                pl.BlockSpec((1, 1), lambda i: (0, 0),
                             memory_space=pltpu.MemorySpace.SMEM),
                pl.BlockSpec((1, 1), lambda i: (0, 0),
                             memory_space=pltpu.MemorySpace.SMEM),
            ),
        ),
        compiler_params=pltpu.CompilerParams(
            dimension_semantics=("arbitrary",),
            vmem_limit_bytes=epi_vmem),
        cost_estimate=pl.CostEstimate(
            flops=int(2 * two_b * BACKBONE_DIM * n_out + 2 * B * B * PROJ_DIM),
            transcendentals=int(2 * B * B + B * l_p + 2 * B),
            bytes_accessed=int(part_bytes + wph.nbytes + bb.nbytes
                               + bh.nbytes + labels2.nbytes + 8)),
    )(partials, labels2, bb, wph, bh)

    return loss[0, 0], acc[0, 0]


def init_params(key, in_dim):
    k1, k2, k3, k4 = jax.random.split(key, 4)
    return {
        "wb": jax.random.normal(k1, (in_dim, BACKBONE_DIM), jnp.float32) * 0.05,
        "bb": jnp.zeros((1, BACKBONE_DIM), jnp.float32),
        "wp": jax.random.normal(k2, (BACKBONE_DIM, PROJ_DIM), jnp.float32) * 0.05,
        "wh": jax.random.normal(k3, (BACKBONE_DIM, LABEL_NUM), jnp.float32) * 0.05,
        "bh": jax.random.normal(k4, (1, LABEL_NUM), jnp.float32) * 0.01,
    }


def clr_reference(y1, y2, labels, params):
    """Pure-JAX f32 reference matching the PyTorch forward (mode='single')."""
    def backbone(x):
        return jax.nn.relu(x.reshape(x.shape[0], -1) @ params["wb"] + params["bb"])

    def info_nce(a, b):
        a = a / jnp.maximum(jnp.linalg.norm(a, axis=1, keepdims=True), 1e-12)
        b = b / jnp.maximum(jnp.linalg.norm(b, axis=1, keepdims=True), 1e-12)
        lg = (a @ b.T) / TEMPERATURE
        idx = jnp.arange(a.shape[0])
        return jnp.mean(jax.nn.logsumexp(lg, axis=1) - lg[idx, idx])

    r1, r2 = backbone(y1), backbone(y2)
    z1, z2 = r1 @ params["wp"], r2 @ params["wp"]
    loss = info_nce(z1, z2) / 2 + info_nce(z2, z1) / 2
    logits = r1 @ params["wh"] + params["bh"]
    ce = jnp.mean(jax.nn.logsumexp(logits, axis=1)
                  - jnp.take_along_axis(logits, labels[:, None], axis=1)[:, 0])
    acc = jnp.mean((jnp.argmax(logits, axis=1) == labels).astype(jnp.float32))
    return loss + ce, acc


if __name__ == "__main__":
    key = jax.random.PRNGKey(0)
    k_y1, k_y2, k_lab, k_par = jax.random.split(key, 4)

    B, C, H, W = 8, 3, 8, 8
    y1 = jax.random.normal(k_y1, (B, C, H, W), jnp.float32)
    y2 = jax.random.normal(k_y2, (B, C, H, W), jnp.float32)
    labels = jax.random.randint(k_lab, (B,), 0, LABEL_NUM, jnp.int32)
    params = init_params(k_par, C * H * W)

    loss, acc = clr_forward(y1, y2, labels, params)
    jax.block_until_ready((loss, acc))

    loss_ref, acc_ref = clr_reference(y1, y2, labels, params)
    assert jnp.isfinite(loss) and jnp.isfinite(acc)
    assert 0.0 <= float(acc) <= 1.0
    # bf16 MXU operands -> loose tolerance against the f32 reference
    assert abs(float(loss) - float(loss_ref)) < 0.1, (float(loss), float(loss_ref))
    print("KERNEL_OK")
</pallas_src>

<mosaic_0001>
module attributes {stable_mosaic.version = 11 : i64} {
  func.func @backbone_kernel(%arg0: i32, %arg1: i32, %arg2: memref<16x128xbf16, #tpu.memory_space<vmem>>, %arg3: memref<128x512xbf16, #tpu.memory_space<vmem>>, %arg4: memref<1x16x512xf32, #tpu.memory_space<vmem>>) attributes {dimension_semantics = [#tpu.dimension_semantics<parallel>, #tpu.dimension_semantics<arbitrary>], iteration_bounds = array<i64: 2, 1>, scalar_prefetch = 0 : i64, scratch_operands = 0 : i64, tpu.core_type = #tpu.core_type<tc>, window_params = [{transform_indices = @transform_0, window_bounds = array<i64: 16, 128>}, {transform_indices = @transform_1, window_bounds = array<i64: 128, 512>}, {transform_indices = @transform_2, window_bounds = array<i64: 1, 16, 512>}]} {
    %c0_i32 = arith.constant 0 : i32
    %0 = arith.cmpi eq, %arg1, %c0_i32 : i32
    %1 = arith.extui %0 : i1 to i32
    %c0_i32_0 = arith.constant 0 : i32
    %2 = arith.cmpi ne, %1, %c0_i32_0 : i32
    scf.if %2 {
      %cst_10 = arith.constant 0.000000e+00 : f32
      %12 = vector.broadcast %cst_10 : f32 to vector<16x512xf32>
      %c0_11 = arith.constant 0 : index
      %c0_12 = arith.constant 0 : index
      %c0_13 = arith.constant 0 : index
      %13 = vector.load %arg4[%c0_11, %c0_12, %c0_13] : memref<1x16x512xf32, #tpu.memory_space<vmem>>, vector<1x16x512xf32>
      %14 = vector.shape_cast %13 : vector<1x16x512xf32> to vector<16x512xf32>
      %15 = vector.shape_cast %12 : vector<16x512xf32> to vector<1x16x512xf32>
      tpu.vector_store %arg4[%c0_11, %c0_12, %c0_13], %15 {strides = array<i32>} : memref<1x16x512xf32, #tpu.memory_space<vmem>>, vector<1x16x512xf32>,
    } else {
    }
    %c0 = arith.constant 0 : index
    %c0_1 = arith.constant 0 : index
    %c0_2 = arith.constant 0 : index
    %3 = vector.load %arg4[%c0, %c0_1, %c0_2] : memref<1x16x512xf32, #tpu.memory_space<vmem>>, vector<1x16x512xf32>
    %4 = vector.shape_cast %3 : vector<1x16x512xf32> to vector<16x512xf32>
    %c0_3 = arith.constant 0 : index
    %c0_4 = arith.constant 0 : index
    %5 = vector.load %arg2[%c0_3, %c0_4] : memref<16x128xbf16, #tpu.memory_space<vmem>>, vector<16x128xbf16>
    %c0_5 = arith.constant 0 : index
    %c0_6 = arith.constant 0 : index
    %6 = vector.load %arg3[%c0_5, %c0_6] : memref<128x512xbf16, #tpu.memory_space<vmem>>, vector<128x512xbf16>
    %cst = arith.constant dense<0.000000e+00> : vector<16x512xf32>
    %7 = tpu.matmul %5, %6, %cst {dimension_numbers = #tpu.dot_dimension_numbers<[1], [0], [0], [1], [0, 0, 1, 1], [], []>} : vector<16x128xbf16>, vector<128x512xbf16>, vector<16x512xf32> -> vector<16x512xf32>
    %8 = arith.addf %4, %7 : vector<16x512xf32>
    %c0_7 = arith.constant 0 : index
    %c0_8 = arith.constant 0 : index
    %c0_9 = arith.constant 0 : index
    %9 = vector.load %arg4[%c0_7, %c0_8, %c0_9] : memref<1x16x512xf32, #tpu.memory_space<vmem>>, vector<1x16x512xf32>
    %10 = vector.shape_cast %9 : vector<1x16x512xf32> to vector<16x512xf32>
    %11 = vector.shape_cast %8 : vector<16x512xf32> to vector<1x16x512xf32>
    tpu.vector_store %arg4[%c0_7, %c0_8, %c0_9], %11 {strides = array<i32>} : memref<1x16x512xf32, #tpu.memory_space<vmem>>, vector<1x16x512xf32>,
    return
  }
  func.func @transform_0(%arg0: i32, %arg1: i32) -> (i32, i32) {
    %c1_i32 = arith.constant 1 : i32
    %0 = arith.muli %arg0, %c1_i32 : i32
    %1 = arith.addi %0, %arg1 : i32
    %c0_i32 = arith.constant 0 : i32
    %c0_i32_0 = arith.constant 0 : i32
    return %c0_i32, %1 : i32, i32
  }
  func.func @transform_1(%arg0: i32, %arg1: i32) -> (i32, i32) {
    %c1_i32 = arith.constant 1 : i32
    %0 = arith.muli %arg0, %c1_i32 : i32
    %1 = arith.addi %0, %arg1 : i32
    %c0_i32 = arith.constant 0 : i32
    %c0_i32_0 = arith.constant 0 : i32
    return %1, %c0_i32 : i32, i32
  }
  func.func @transform_2(%arg0: i32, %arg1: i32) -> (i32, i32, i32) {
    %c0_i32 = arith.constant 0 : i32
    %c0_i32_0 = arith.constant 0 : i32
    %c0_i32_1 = arith.constant 0 : i32
    return %arg0, %c0_i32, %c0_i32_0 : i32, i32, i32
  }
}

</mosaic_0001>

<llo_original>
// kernel: tpu_custom_call.1
$region0: #{tpu_custom_call.1}
  #allocation0 [shape = 'u32[]', space=smem, size = 0x4, offset = 0x4, fixed_abs, tag = 'smem constant byte address 0x4 - core index']
  #allocation1 [shape = 'u32[144,128]{1,0:T(1,128)}', space=vmem, size = 0x12000, scoped, tag = 'internal scratch']
  %s0 = inlined_call_operand.hbm [shape: bf16[16,256], index: 0, kind: input, shape index: {}]
  %s1 = inlined_call_operand.hbm [shape: bf16[256,512], index: 1, kind: input, shape index: {}]
  %s2 = inlined_call_operand.hbm [shape: f32[2,16,512], index: 2, kind: output, shape index: {}]
  %s3 = sld [smem:[#allocation0]]
  $region53: #{tpu_custom_call.1} parent=0
    _
  %s5 = ssub.s32 1, %s3
  %s6 = scalar_select 0, %s5, %s3
  $region1: #{tpu_custom_call.1} parent=0
    #allocation2 [shape = 'u8[8192]{0}', space=vmem, size = 0x2000, scoped, tag = 'input window, operand 0']
    #allocation3 [shape = 's32[2]{0}', space=sflag, size = 0x8, scoped, tag = 'scoped memory for tpu_custom_call.1']
    #allocation4 [shape = 's32[2]{0}', space=sflag, size = 0x8, scoped, tag = 'scoped memory for tpu_custom_call.1']
    #allocation5 [shape = 'u8[262144]{0}', space=vmem, size = 0x40000, scoped, tag = 'input window, operand 1']
    #allocation6 [shape = 's32[2]{0}', space=sflag, size = 0x8, scoped, tag = 'scoped memory for tpu_custom_call.1']
    #allocation7 [shape = 'u8[65536]{0}', space=vmem, size = 0x10000, scoped, tag = 'output window, operand 0']
    %7 = vsyncpa [#allocation3], 0
    %s8 = scalar_lea.sflag [#allocation3], 1
    %9 = vsyncpa %s8, 0
    %10 = vsyncpa [#allocation6], 0
    %s11 = scalar_lea.sflag [#allocation6], 1
    %12 = vsyncpa %s11, 0
    %13 = vsyncpa [#allocation4], 0
    %s14 = scalar_lea.sflag [#allocation4], 1
    %15 = vsyncpa %s14, 0
    loop: start=0, step=1, limit=4
    $region2: #{tpu_custom_call.1} parent=1 // loop_pre_header
      _
    $region3: #{tpu_custom_call.1} parent=1 // loop_header
      %s17 = sphi 0, %s21
      %p18 = scmp.ge.s32.totalorder %s17, 4
      %s24 = sphi 0, %s36
      %s25 = sphi 0, %s32
      %s26 = sphi 0, %s24
      %s27 = sphi 0, %s25
      %s28 = sphi 0, %s26
      %s29 = sphi 0, %s27
      %s41 = sphi 0, %s43
      %s44 = sphi 0, %s41
      %s45 = sphi 0, %s44
      %s61 = sphi 0, %s45
      %s69 = sphi 0, %s71
      %s72 = sphi 0, %s69
      %s73 = sphi 0, %s72
      %s89 = sphi 0, %s73
      %s95 = sphi 0, %s97
      %s98 = sphi 0, %s95
      %s99 = sphi 0, %s98
      %s115 = sphi 0, %s99
    $region4: #{tpu_custom_call.1} parent=1 // loop_header_branch
      %20 = sbr.rel (%p18) target = $region8
    $region5: #{tpu_custom_call.1} parent=1 // loop_body
      %s22 = ssub.s32 %s17, 1
      %s23 = ssub.s32 %s17, 2
      %s30 = sadd.s32 1, %s25
      %p31 = scmp.ge.s32.totalorder %s30, 1
      %s32 = scalar_select %p31, 0, %s30
      %s33 = sadd.s32 1, %s24
      %s34 = scalar_select %p31, %s33, %s24
      %p35 = scmp.ge.s32.totalorder %s34, 2
      %s36 = scalar_select %p35, 0, %s34
      %s37 = sadd.s32 %s24, %s25
      %s38 = sadd.s32 %s36, %s32
      %s39 = ssub.s32 %s37, %s38
      %p40 = scmp.eq.s32.totalorder %s39, 0
      %s42 = sadd.s32 %s41, 1
      %s43 = scalar_select %p40, %s41, %s42
      %p46 = pneg %p40
      %p47 = scmp.eq.s32.totalorder %s17, 1
      %p48 = por %p46, %p47
      %p49 = scmp.ne.s32.totalorder %s41, %s44
      %p50 = scmp.eq.s32.totalorder %s17, 0
      %p51 = por %p49, %p50
      %p52 = scmp.ne.s32.totalorder %s41, %s44
      %p53 = scmp.eq.s32.totalorder %s22, 1
      %p54 = por %p52, %p53
      %p55 = scmp.ne.s32.totalorder %s44, %s45
      %p56 = scmp.eq.s32.totalorder %s22, 0
      %p57 = por %p55, %p56
      %p58 = scmp.ne.s32.totalorder %s44, %s45
      %p59 = scmp.eq.s32.totalorder %s23, 1
      %p60 = por %p58, %p59
      %p62 = scmp.ne.s32.totalorder %s45, %s61
      %p63 = scmp.eq.s32.totalorder %s23, 0
      %p64 = por %p62, %p63
      %s65 = sadd.s32 %s24, %s25
      %s66 = sadd.s32 %s36, %s32
      %s67 = ssub.s32 %s65, %s66
      %p68 = scmp.eq.s32.totalorder %s67, 0
      %s70 = sadd.s32 %s69, 1
      %s71 = scalar_select %p68, %s69, %s70
      %p74 = pneg %p68
      %p75 = scmp.eq.s32.totalorder %s17, 1
      %p76 = por %p74, %p75
      %p77 = scmp.ne.s32.totalorder %s69, %s72
      %p78 = scmp.eq.s32.totalorder %s17, 0
      %p79 = por %p77, %p78
      %p80 = scmp.ne.s32.totalorder %s69, %s72
      %p81 = scmp.eq.s32.totalorder %s22, 1
      %p82 = por %p80, %p81
      %p83 = scmp.ne.s32.totalorder %s72, %s73
      %p84 = scmp.eq.s32.totalorder %s22, 0
      %p85 = por %p83, %p84
      %p86 = scmp.ne.s32.totalorder %s72, %s73
      %p87 = scmp.eq.s32.totalorder %s23, 1
      %p88 = por %p86, %p87
      %p90 = scmp.ne.s32.totalorder %s73, %s89
      %p91 = scmp.eq.s32.totalorder %s23, 0
      %p92 = por %p90, %p91
      %s93 = ssub.s32 %s24, %s36
      %p94 = scmp.eq.s32.totalorder %s93, 0
      %s96 = sadd.s32 %s95, 1
      %s97 = scalar_select %p94, %s95, %s96
      %p100 = pneg %p94
      %p101 = scmp.eq.s32.totalorder %s17, 1
      %p102 = por %p100, %p101
      %p103 = scmp.ne.s32.totalorder %s95, %s98
      %p104 = scmp.eq.s32.totalorder %s17, 0
      %p105 = por %p103, %p104
      %p106 = scmp.ne.s32.totalorder %s95, %s98
      %p107 = scmp.eq.s32.totalorder %s22, 1
      %p108 = por %p106, %p107
      %p109 = scmp.ne.s32.totalorder %s98, %s99
      %p110 = scmp.eq.s32.totalorder %s22, 0
      %p111 = por %p109, %p110
      %p112 = scmp.ne.s32.totalorder %s98, %s99
      %p113 = scmp.eq.s32.totalorder %s23, 1
      %p114 = por %p112, %p113
      %p116 = scmp.ne.s32.totalorder %s99, %s115
      %p117 = scmp.eq.s32.totalorder %s23, 0
      %p118 = por %p116, %p117
      %p119 = scmp.le.s32.totalorder 1, %s17
      %p120 = scmp.lt.s32.totalorder %s17, 3
      %p121 = pnand %p119, %p120
      %p122 = pneg %p121
      // Predicated region
      $region9: #{tpu_custom_call.1} parent=5 // pred_check
        _
      $region10: #{tpu_custom_call.1} parent=5 // pred_check_branch
        %124 = sbr.rel (%p121) target = $region12
      $region11: #{tpu_custom_call.1} parent=5 // pred_region
        %s125 = ssub.s32 %s17, 1
      $region12: #{tpu_custom_call.1} parent=5 // pred_fallthru
        _
      %p126 = scmp.lt.s32.totalorder %s17, 2
      // Predicated region
      $region13: #{tpu_custom_call.1} parent=5 // pred_check
        %p127 = pneg %p126
      $region14: #{tpu_custom_call.1} parent=5 // pred_check_branch
        %129 = sbr.rel (%p127) target = $region16
      $region15: #{tpu_custom_call.1} parent=5 // pred_region
        // Predicated region
        $region17: #{tpu_custom_call.1} parent=15 // pred_check
          %p130 = pneg %p51
        $region18: #{tpu_custom_call.1} parent=15 // pred_check_branch
          %132 = sbr.rel (%p130) target = $region20
        $region19: #{tpu_custom_call.1} parent=15 // pred_region
          %s133 = sand.u32 %s41, 1
          %s134 = scalar_lea.sflag [#allocation3], %s133
          %s135 = sand.u32 %s41, 1
          %s136 = smul.addr %s135, 8
          %s137 = scalar_lea.vmem [#allocation2], %s136
          %s138 = sadd.s32 %s24, %s25
          %s140 = ssub.s32 128, 128
          %141 = vsyncadd %s134, %s140
          %s142 = smul.addr %s138, 64
          %s143 = scalar_lea.hbm %s0, %s142
          %s144 = sshll.u32 %s137, 4
          %s145 = int_to_ptr.vmem [resolvable:$true] %s144
          %150 = dma.hbm_to_vmem [thread:$0]  %s143, 128, %s145, %s134, 128, 64, 4
        $region20: #{tpu_custom_call.1} parent=15 // pred_fallthru
          _
        // Predicated region
        $region21: #{tpu_custom_call.1} parent=15 // pred_check
          %p151 = pneg %p79
        $region22: #{tpu_custom_call.1} parent=15 // pred_check_branch
          %153 = sbr.rel (%p151) target = $region24
        $region23: #{tpu_custom_call.1} parent=15 // pred_region
          %s154 = sand.u32 %s69, 1
          %s155 = scalar_lea.sflag [#allocation6], %s154
          %s156 = sand.u32 %s69, 1
          %s157 = smul.addr %s156, 256
          %s158 = scalar_lea.vmem [#allocation5], %s157
          %s159 = sadd.s32 %s24, %s25
          %s160 = smul.u32 16, %s159
          %s162 = ssub.s32 4096, 4096
          %163 = vsyncadd %s155, %s162
          %s164 = smul.addr %s160, 4
          %s165 = smul.addr %s164, 64
          %s166 = scalar_lea.hbm %s1, %s165
          %s167 = sshll.u32 %s158, 4
          %s168 = int_to_ptr.vmem [resolvable:$true] %s167
          %173 = dma.hbm_to_vmem [thread:$0]  %s166, 4096, %s168, %s155, 256, 256, 16
        $region24: #{tpu_custom_call.1} parent=15 // pred_fallthru
          _
      $region16: #{tpu_custom_call.1} parent=5 // pred_fallthru
        _
      %p174 = scmp.le.s32.totalorder 1, %s17
      %p175 = scmp.lt.s32.totalorder %s17, 3
      %p176 = pnand %p174, %p175
      %p177 = pneg %p176
      // Predicated region
      $region25: #{tpu_custom_call.1} parent=5 // pred_check
        _
      $region26: #{tpu_custom_call.1} parent=5 // pred_check_branch
        %179 = sbr.rel (%p176) target = $region28
      $region27: #{tpu_custom_call.1} parent=5 // pred_region
        %s180 = ssub.s32 %s17, 1
        %s181 = sand.u32 %s44, 1
        %s182 = scalar_lea.sflag [#allocation3], %s181
        %s183 = sand.u32 %s44, 1
        %s184 = smul.addr %s183, 8
        %s185 = scalar_lea.vmem [#allocation2], %s184
        // Predicated region
        $region29: #{tpu_custom_call.1} parent=27 // pred_check
          %p186 = pneg %p57
        $region30: #{tpu_custom_call.1} parent=27 // pred_check_branch
          %188 = sbr.rel (%p186) target = $region32
        $region31: #{tpu_custom_call.1} parent=27 // pred_region
          %189 = dma.done %s182, 128
        $region32: #{tpu_custom_call.1} parent=27 // pred_fallthru
          _
        %s190 = sand.u32 %s72, 1
        %s191 = scalar_lea.sflag [#allocation6], %s190
        %s192 = sand.u32 %s72, 1
        %s193 = smul.addr %s192, 256
        %s194 = scalar_lea.vmem [#allocation5], %s193
        // Predicated region
        $region33: #{tpu_custom_call.1} parent=27 // pred_check
          %p195 = pneg %p85
        $region34: #{tpu_custom_call.1} parent=27 // pred_check_branch
          %197 = sbr.rel (%p195) target = $region36
        $region35: #{tpu_custom_call.1} parent=27 // pred_region
          %198 = dma.done %s191, 4096
        $region36: #{tpu_custom_call.1} parent=27 // pred_fallthru
          _
        %s199 = sand.u32 %s44, 1
        %s200 = scalar_lea.sflag [#allocation3], %s199
        %s201 = sand.u32 %s44, 1
        %s202 = smul.addr %s201, 8
        %s203 = scalar_lea.vmem [#allocation2], %s202
        %p204 = pneg %p57
        %p205 = pneg %p54
        %s206 = sand.u32 %s72, 1
        %s207 = scalar_lea.sflag [#allocation6], %s206
        %s208 = sand.u32 %s72, 1
        %s209 = smul.addr %s208, 256
        %s210 = scalar_lea.vmem [#allocation5], %s209
        %p211 = pneg %p85
        %p212 = pneg %p82
        %p213 = pneg %p111
        %p214 = pneg %p108
        %s215 = sand.u32 %s98, 1
        %s216 = scalar_lea.sflag [#allocation4], %s215
        %s217 = sand.u32 %s98, 1
        %s218 = smul.addr %s217, 64
        %s219 = scalar_lea.vmem [#allocation7], %s218
        %s220 = sadd.s32 %s26, %s27
        %s221 = sadd.s32 %s26, %s27
        %s222 = smul.u32 16, %s221
        %p224 = scmp.eq.s32.totalorder %s27, 0
        // Predicated region
        $region37: #{tpu_custom_call.1} parent=27 // pred_check
          %p225 = pneg %p224
        $region38: #{tpu_custom_call.1} parent=27 // pred_check_branch
          %227 = sbr.rel (%p225) target = $region40
        $region39: #{tpu_custom_call.1} parent=27 // pred_region
          %228 = vst [vmem:[%s219] sm:$0xff] 0.0
          %229 = vst [vmem:[%s219 + $0x8] sm:$0xff] 0.0
          %230 = vst [vmem:[%s219 + $0x10] sm:$0xff] 0.0
          %231 = vst [vmem:[%s219 + $0x18] sm:$0xff] 0.0
          %232 = vst [vmem:[%s219 + $0x20] sm:$0xff] 0.0
          %233 = vst [vmem:[%s219 + $0x28] sm:$0xff] 0.0
          %234 = vst [vmem:[%s219 + $0x30] sm:$0xff] 0.0
          %235 = vst [vmem:[%s219 + $0x38] sm:$0xff] 0.0
        $region40: #{tpu_custom_call.1} parent=27 // pred_fallthru
          _
        %v236 = vld [vmem:[%s219] sm:$0xff]
        %v237 = vld [vmem:[%s219 + $0x8] sm:$0xff]
        %v238 = vld [vmem:[%s219 + $0x10] sm:$0xff]
        %v239 = vld [vmem:[%s219 + $0x18] sm:$0xff]
        %v240 = vld [vmem:[%s219 + $0x20] sm:$0xff]
        %v241 = vld [vmem:[%s219 + $0x28] sm:$0xff]
        %v242 = vld [vmem:[%s219 + $0x30] sm:$0xff]
        %v243 = vld [vmem:[%s219 + $0x38] sm:$0xff]
        %v244 = vld [vmem:[%s185] sm:$0xf]
        %v245 = vld [vmem:[%s185 + $0x4] sm:$0xf]
        %v246 = vld [vmem:[%s194] sm:$0xff]
        %v247 = vld [vmem:[%s194 + $0x8] sm:$0xff]
        %v248 = vld [vmem:[%s194 + $0x10] sm:$0xff]
        %v249 = vld [vmem:[%s194 + $0x18] sm:$0xff]
        %v250 = vld [vmem:[%s194 + $0x20] sm:$0xff]
        %v251 = vld [vmem:[%s194 + $0x28] sm:$0xff]
        %v252 = vld [vmem:[%s194 + $0x30] sm:$0xff]
        %v253 = vld [vmem:[%s194 + $0x38] sm:$0xff]
        %v254 = vld [vmem:[%s194 + $0x40] sm:$0xff]
        %v255 = vld [vmem:[%s194 + $0x48] sm:$0xff]
        %v256 = vld [vmem:[%s194 + $0x50] sm:$0xff]
        %v257 = vld [vmem:[%s194 + $0x58] sm:$0xff]
        %v258 = vld [vmem:[%s194 + $0x60] sm:$0xff]
        %v259 = vld [vmem:[%s194 + $0x68] sm:$0xff]
        %v260 = vld [vmem:[%s194 + $0x70] sm:$0xff]
        %v261 = vld [vmem:[%s194 + $0x78] sm:$0xff]
        %v262 = vld [vmem:[%s194 + $0x80] sm:$0xff]
        %v263 = vld [vmem:[%s194 + $0x88] sm:$0xff]
        %v264 = vld [vmem:[%s194 + $0x90] sm:$0xff]
        %v265 = vld [vmem:[%s194 + $0x98] sm:$0xff]
        %v266 = vld [vmem:[%s194 + $0xa0] sm:$0xff]
        %v267 = vld [vmem:[%s194 + $0xa8] sm:$0xff]
        %v268 = vld [vmem:[%s194 + $0xb0] sm:$0xff]
        %v269 = vld [vmem:[%s194 + $0xb8] sm:$0xff]
        %v270 = vld [vmem:[%s194 + $0xc0] sm:$0xff]
        %v271 = vld [vmem:[%s194 + $0xc8] sm:$0xff]
        %v272 = vld [vmem:[%s194 + $0xd0] sm:$0xff]
        %v273 = vld [vmem:[%s194 + $0xd8] sm:$0xff]
        %v274 = vld [vmem:[%s194 + $0xe0] sm:$0xff]
        %v275 = vld [vmem:[%s194 + $0xe8] sm:$0xff]
        %v276 = vld [vmem:[%s194 + $0xf0] sm:$0xff]
        %v277 = vld [vmem:[%s194 + $0xf8] sm:$0xff]
        %v280 = vunpack.c.l.b16 %v244
        %v281 = vunpack.c.l.b16 %v245
        %v282 = vpack.c.b16 %v281, %v280
        %v316 = vunpack.c.l.b16 %v246
        %v317 = vunpack.c.h.b16 %v246
        %v318 = vunpack.c.l.b16 %v247
        %v319 = vunpack.c.h.b16 %v247
        %v320 = vunpack.c.l.b16 %v248
        %v321 = vunpack.c.h.b16 %v248
        %v322 = vunpack.c.l.b16 %v249
        %v323 = vunpack.c.h.b16 %v249
        %v324 = vunpack.c.l.b16 %v250
        %v325 = vunpack.c.h.b16 %v250
        %v326 = vunpack.c.l.b16 %v251
        %v327 = vunpack.c.h.b16 %v251
        %v328 = vunpack.c.l.b16 %v252
        %v329 = vunpack.c.h.b16 %v252
        %v330 = vunpack.c.l.b16 %v253
        %v331 = vunpack.c.h.b16 %v253
        %v332 = vunpack.c.l.b16 %v254
        %v333 = vunpack.c.h.b16 %v254
        %v334 = vunpack.c.l.b16 %v255
        %v335 = vunpack.c.h.b16 %v255
        %v336 = vunpack.c.l.b16 %v256
        %v337 = vunpack.c.h.b16 %v256
        %v338 = vunpack.c.l.b16 %v257
        %v339 = vunpack.c.h.b16 %v257
        %v340 = vunpack.c.l.b16 %v258
        %v341 = vunpack.c.h.b16 %v258
        %v342 = vunpack.c.l.b16 %v259
        %v343 = vunpack.c.h.b16 %v259
        %v344 = vunpack.c.l.b16 %v260
        %v345 = vunpack.c.h.b16 %v260
        %v346 = vunpack.c.l.b16 %v261
        %v347 = vunpack.c.h.b16 %v261
        %v348 = vunpack.c.l.b16 %v262
        %v349 = vunpack.c.h.b16 %v262
        %v350 = vunpack.c.l.b16 %v263
        %v351 = vunpack.c.h.b16 %v263
        %v352 = vunpack.c.l.b16 %v264
        %v353 = vunpack.c.h.b16 %v264
        %v354 = vunpack.c.l.b16 %v265
        %v355 = vunpack.c.h.b16 %v265
        %v356 = vunpack.c.l.b16 %v266
        %v357 = vunpack.c.h.b16 %v266
        %v358 = vunpack.c.l.b16 %v267
        %v359 = vunpack.c.h.b16 %v267
        %v360 = vunpack.c.l.b16 %v268
        %v361 = vunpack.c.h.b16 %v268
        %v362 = vunpack.c.l.b16 %v269
        %v363 = vunpack.c.h.b16 %v269
        %v364 = vunpack.c.l.b16 %v270
        %v365 = vunpack.c.h.b16 %v270
        %v366 = vunpack.c.l.b16 %v271
        %v367 = vunpack.c.h.b16 %v271
        %v368 = vunpack.c.l.b16 %v272
        %v369 = vunpack.c.h.b16 %v272
        %v370 = vunpack.c.l.b16 %v273
        %v371 = vunpack.c.h.b16 %v273
        %v372 = vunpack.c.l.b16 %v274
        %v373 = vunpack.c.h.b16 %v274
        %v374 = vunpack.c.l.b16 %v275
        %v375 = vunpack.c.h.b16 %v275
        %v376 = vunpack.c.l.b16 %v276
        %v377 = vunpack.c.h.b16 %v276
        %v378 = vunpack.c.l.b16 %v277
        %v379 = vunpack.c.h.b16 %v277
        %v380 = vpack.c.b16 %v320, %v316
        %v381 = vpack.c.b16 %v321, %v317
        %v382 = vpack.c.b16 %v322, %v318
        %v383 = vpack.c.b16 %v323, %v319
        %v384 = vpack.c.b16 %v328, %v324
        %v385 = vpack.c.b16 %v329, %v325
        %v386 = vpack.c.b16 %v330, %v326
        %v387 = vpack.c.b16 %v331, %v327
        %v388 = vpack.c.b16 %v336, %v332
        %v389 = vpack.c.b16 %v337, %v333
        %v390 = vpack.c.b16 %v338, %v334
        %v391 = vpack.c.b16 %v339, %v335
        %v392 = vpack.c.b16 %v344, %v340
        %v393 = vpack.c.b16 %v345, %v341
        %v394 = vpack.c.b16 %v346, %v342
        %v395 = vpack.c.b16 %v347, %v343
        %v396 = vpack.c.b16 %v352, %v348
        %v397 = vpack.c.b16 %v353, %v349
        %v398 = vpack.c.b16 %v354, %v350
        %v399 = vpack.c.b16 %v355, %v351
        %v400 = vpack.c.b16 %v360, %v356
        %v401 = vpack.c.b16 %v361, %v357
        %v402 = vpack.c.b16 %v362, %v358
        %v403 = vpack.c.b16 %v363, %v359
        %v404 = vpack.c.b16 %v368, %v364
        %v405 = vpack.c.b16 %v369, %v365
        %v406 = vpack.c.b16 %v370, %v366
        %v407 = vpack.c.b16 %v371, %v367
        %v408 = vpack.c.b16 %v376, %v372
        %v409 = vpack.c.b16 %v377, %v373
        %v410 = vpack.c.b16 %v378, %v374
        %v411 = vpack.c.b16 %v379, %v375
        %444 = vmatprep.subr.bf16.mxu0 %v381
        %445 = vmatpush1.bf16.msra.mxu0 %v380
        %446 = vmatprep.subr.bf16.mxu0 %v385
        %447 = vmatpush1.bf16.msra.mxu0 %v384
        %448 = vmatprep.subr.bf16.mxu0 %v389
        %449 = vmatpush1.bf16.msra.mxu0 %v388
        %450 = vmatprep.subr.bf16.mxu0 %v393
        %451 = vmatpush1.bf16.msra.mxu0 %v392
        %452 = vmatprep.subr.bf16.mxu0 %v397
        %453 = vmatpush1.bf16.msra.mxu0 %v396
        %454 = vmatprep.subr.bf16.mxu0 %v401
        %455 = vmatpush1.bf16.msra.mxu0 %v400
        %456 = vmatprep.subr.bf16.mxu0 %v405
        %457 = vmatpush1.bf16.msra.mxu0 %v404
        %458 = vmatprep.subr.bf16.mxu0 %v409
        %459 = vmatpush1.bf16.msra.mxu0 %v408
        %460 = vmatprep.subr.bf16.mxu0 0
        %461 = vmatpush1.bf16.msra.mxu0 0
        %462 = vmatprep.subr.bf16.mxu0 0
        %463 = vmatpush1.bf16.msra.mxu0 0
        %464 = vmatprep.subr.bf16.mxu0 0
        %465 = vmatpush1.bf16.msra.mxu0 0
        %466 = vmatprep.subr.bf16.mxu0 0
        %467 = vmatpush1.bf16.msra.mxu0 0
        %468 = vmatprep.subr.bf16.mxu0 0
        %469 = vmatpush1.bf16.msra.mxu0 0
        %470 = vmatprep.subr.bf16.mxu0 0
        %471 = vmatpush1.bf16.msra.mxu0 0
        %472 = vmatprep.subr.bf16.mxu0 0
        %473 = vmatpush1.bf16.msra.mxu0 0
        %474 = vmatprep.subr.bf16.mxu0 0
        %475 = vmatpush1.bf16.msra.mxu0 0
        %476 = vmatprep.mubr.bf16.mxu0 0
        %477 = vmatmul.mubr.bf16.gmra.mrb[0].mxu0 %v282
        %v478 = vpop.f32.mrb[0].mxu0
        %v479 = vadd.f32 0.0, %v478
        %v480 = vpop.f32.mrb[0].mxu0
        %v481 = vadd.f32 0.0, %v480
        %v482 = vpop.f32.mrb[0].mxu0
        %v483 = vadd.f32 0.0, %v482
        %v484 = vpop.f32.mrb[0].mxu0
        %v485 = vadd.f32 0.0, %v484
        %486 = vdwg.mxu0
        %487 = vmatprep.subr.bf16.mxu0 %v383
        %488 = vmatpush1.bf16.msra.mxu0 %v382
        %489 = vmatprep.subr.bf16.mxu0 %v387
        %490 = vmatpush1.bf16.msra.mxu0 %v386
        %491 = vmatprep.subr.bf16.mxu0 %v391
        %492 = vmatpush1.bf16.msra.mxu0 %v390
        %493 = vmatprep.subr.bf16.mxu0 %v395
        %494 = vmatpush1.bf16.msra.mxu0 %v394
        %495 = vmatprep.subr.bf16.mxu0 %v399
        %496 = vmatpush1.bf16.msra.mxu0 %v398
        %497 = vmatprep.subr.bf16.mxu0 %v403
        %498 = vmatpush1.bf16.msra.mxu0 %v402
        %499 = vmatprep.subr.bf16.mxu0 %v407
        %500 = vmatpush1.bf16.msra.mxu0 %v406
        %501 = vmatprep.subr.bf16.mxu0 %v411
        %502 = vmatpush1.bf16.msra.mxu0 %v410
        %503 = vmatprep.subr.bf16.mxu0 0
        %504 = vmatpush1.bf16.msra.mxu0 0
        %505 = vmatprep.subr.bf16.mxu0 0
        %506 = vmatpush1.bf16.msra.mxu0 0
        %507 = vmatprep.subr.bf16.mxu0 0
        %508 = vmatpush1.bf16.msra.mxu0 0
        %509 = vmatprep.subr.bf16.mxu0 0
        %510 = vmatpush1.bf16.msra.mxu0 0
        %511 = vmatprep.subr.bf16.mxu0 0
        %512 = vmatpush1.bf16.msra.mxu0 0
        %513 = vmatprep.subr.bf16.mxu0 0
        %514 = vmatpush1.bf16.msra.mxu0 0
        %515 = vmatprep.subr.bf16.mxu0 0
        %516 = vmatpush1.bf16.msra.mxu0 0
        %517 = vmatprep.subr.bf16.mxu0 0
        %518 = vmatpush1.bf16.msra.mxu0 0
        %519 = vmatprep.mubr.bf16.mxu0 0
        %520 = vmatmul.mubr.bf16.gmra.mrb[0].mxu0 %v282
        %v521 = vpop.f32.mrb[0].mxu0
        %v522 = vadd.f32 0.0, %v521
        %v523 = vpop.f32.mrb[0].mxu0
        %v524 = vadd.f32 0.0, %v523
        %v525 = vpop.f32.mrb[0].mxu0
        %v526 = vadd.f32 0.0, %v525
        %v527 = vpop.f32.mrb[0].mxu0
        %v528 = vadd.f32 0.0, %v527
        %529 = vdwg.mxu0
        %v530 = vadd.f32 %v236, %v479
        %v531 = vadd.f32 %v237, %v481
        %v532 = vadd.f32 %v238, %v522
        %v533 = vadd.f32 %v239, %v524
        %v534 = vadd.f32 %v240, %v483
        %v535 = vadd.f32 %v241, %v485
        %v536 = vadd.f32 %v242, %v526
        %v537 = vadd.f32 %v243, %v528
        %538 = vst [vmem:[%s219] sm:$0xff] %v530
        %539 = vst [vmem:[%s219 + $0x8] sm:$0xff] %v531
        %540 = vst [vmem:[%s219 + $0x10] sm:$0xff] %v532
        %541 = vst [vmem:[%s219 + $0x18] sm:$0xff] %v533
        %542 = vst [vmem:[%s219 + $0x20] sm:$0xff] %v534
        %543 = vst [vmem:[%s219 + $0x28] sm:$0xff] %v535
        %544 = vst [vmem:[%s219 + $0x30] sm:$0xff] %v536
        %545 = vst [vmem:[%s219 + $0x38] sm:$0xff] %v537
        %s546 = sand.u32 %s98, 1
        %s547 = scalar_lea.sflag [#allocation4], %s546
        %s548 = sand.u32 %s98, 1
        %s549 = smul.addr %s548, 64
        %s550 = scalar_lea.vmem [#allocation7], %s549
        // Predicated region
        $region41: #{tpu_custom_call.1} parent=27 // pred_check
          %p551 = pneg %p108
        $region42: #{tpu_custom_call.1} parent=27 // pred_check_branch
          %553 = sbr.rel (%p551) target = $region44
        $region43: #{tpu_custom_call.1} parent=27 // pred_region
          %s555 = ssub.s32 1024, 1024
          %556 = vsyncadd %s547, %s555
          %s557 = smul.addr %s26, 8
          %s558 = smul.addr %s557, 128
          %s559 = scalar_lea.hbm %s2, %s558
          %s560 = sshll.u32 %s550, 4
          %s561 = int_to_ptr.vmem [resolvable:$true] %s560
          %566 = dma.vmem_to_hbm [thread:$0]  %s561, 1024, %s559, %s547, 512, 512, 32
        $region44: #{tpu_custom_call.1} parent=27 // pred_fallthru
          _
      $region28: #{tpu_custom_call.1} parent=5 // pred_fallthru
        _
      %p567 = scmp.le.s32.totalorder 2, %s17
      // Predicated region
      $region45: #{tpu_custom_call.1} parent=5 // pred_check
        %p568 = pneg %p567
      $region46: #{tpu_custom_call.1} parent=5 // pred_check_branch
        %570 = sbr.rel (%p568) target = $region48
      $region47: #{tpu_custom_call.1} parent=5 // pred_region
        %s571 = ssub.s32 %s17, 2
        // Predicated region
        $region49: #{tpu_custom_call.1} parent=47 // pred_check
          %p572 = pneg %p114
        $region50: #{tpu_custom_call.1} parent=47 // pred_check_branch
          %574 = sbr.rel (%p572) target = $region52
        $region51: #{tpu_custom_call.1} parent=47 // pred_region
          %s575 = sand.u32 %s99, 1
          %s576 = scalar_lea.sflag [#allocation4], %s575
          %s577 = sand.u32 %s99, 1
          %s578 = smul.addr %s577, 64
          %s579 = scalar_lea.vmem [#allocation7], %s578
          %580 = dma.done %s576, 1024
        $region52: #{tpu_custom_call.1} parent=47 // pred_fallthru
          _
      $region48: #{tpu_custom_call.1} parent=5 // pred_fallthru
        _
    $region6: #{tpu_custom_call.1} parent=1 // loop_footer
      %s21 = sadd.s32 1, %s17
    $region7: #{tpu_custom_call.1} parent=1 // loop_footer_branch
      %16 = sbr.rel target = $region3
    $region8: #{tpu_custom_call.1} parent=1 // loop_exit
      _
    %581 = vsyncpa [#allocation3], 1
    %s582 = scalar_lea.sflag [#allocation3], 1
    %583 = vsyncpa %s582, 1
    %584 = vsyncpa [#allocation6], 1
    %s585 = scalar_lea.sflag [#allocation6], 1
    %586 = vsyncpa %s585, 1
    %587 = vsyncpa [#allocation4], 1
    %s588 = scalar_lea.sflag [#allocation4], 1
    %589 = vsyncpa %s588, 1

</llo_original>
